<compile_context>
chip_gen: v6e
topology: v6e:2x2x1
jax: 0.10.0
libtpu: 0.0.40
codegen_flags: <defaults>
</compile_context>

<pallas_src>
import jax
import jax.numpy as jnp
from jax import lax
from jax.experimental import pallas as pl
from jax.experimental.pallas import tpu as pltpu

_EPS = 1e-5


# --------------------------------------------------------------------------- #
# generation-aware budgets
# --------------------------------------------------------------------------- #
def _vmem_limit_bytes():
    cap = 64 << 20                     # conservative default (v7x physical)
    try:
        info = pltpu.get_tpu_info()
        cap = int(getattr(info, "vmem_capacity_bytes", cap)) or cap
    except Exception:
        pass
    # half of physical, clamped: 32 MiB on v7x, 64 MiB on v5e/v6e.
    return min(max(cap // 2, 16 << 20), 96 << 20)


def _pick_tiles(rows, S, itemsize, budget_bytes):
    """Byte-budgeted (row, lane) tile.  ts is a multiple of 128 dividing S (or S
    itself); R is a multiple of 8 (ragged last block is fine) or the full rows."""
    if S % 128 == 0:
        max_ts = max(128, (budget_bytes // (8 * itemsize)) // 128 * 128)
        if S <= max_ts:
            ts = S
        else:
            ts = 128
            for m in range(max_ts // 128, 0, -1):
                if S % (128 * m) == 0:
                    ts = 128 * m
                    break
    else:
        # TODO(synk): ragged S falls back to one full-S lane block per row tile;
        # for huge ragged volumes pad S to a 128 multiple and mask instead.
        ts = S
    max_r = max(8, (budget_bytes // max(ts * itemsize, 1)) // 8 * 8)
    if rows <= max_r:
        r = rows
    else:
        r = min(max_r, max(rows // 8 * 8, 8))
    return r, ts


# --------------------------------------------------------------------------- #
# sweep 1: stats kernel (vreg-carried accumulators, single store per step)
# --------------------------------------------------------------------------- #
def _stats_kernel(x_ref, sum_ref, sq_ref):
    @pl.when(pl.program_id(2) == 0)
    def _():
        sum_ref[...] = jnp.zeros_like(sum_ref)
        sq_ref[...] = jnp.zeros_like(sq_ref)

    ts = x_ref.shape[-1]
    n128 = ts // 128
    rem = ts - n128 * 128

    # load accumulators once, carry in vregs, store once at the end of the step
    acc_s = sum_ref[...]
    acc_q = sq_ref[...]

    if n128 > 0:
        def body(k, carry):
            a_s, a_q = carry
            start = pl.multiple_of(k * 128, 128)
            c = x_ref[:, pl.ds(start, 128)].astype(jnp.float32)
            return a_s + c, a_q + c * c

        acc_s, acc_q = lax.fori_loop(0, n128, body, (acc_s, acc_q),
                                     unroll=min(8, n128))

    if rem:  # ragged tail (only when ts == S and S % 128 != 0): fold into lane 0
        c = x_ref[:, pl.ds(n128 * 128, rem)].astype(jnp.float32)
        lane = lax.broadcasted_iota(jnp.int32, acc_s.shape, 1)
        acc_s = acc_s + jnp.where(lane == 0,
                                  jnp.sum(c, axis=-1, keepdims=True), 0.0)
        acc_q = acc_q + jnp.where(lane == 0,
                                  jnp.sum(c * c, axis=-1, keepdims=True), 0.0)

    sum_ref[...] = acc_s
    sq_ref[...] = acc_q


# --------------------------------------------------------------------------- #
# sweep 2: apply kernel (scale/shift already fold mean, var, eps, affine)
# --------------------------------------------------------------------------- #
def _apply_kernel(x_ref, scale_ref, shift_ref, o_ref):
    x = x_ref[...].astype(jnp.float32)
    o_ref[...] = (x * scale_ref[...] + shift_ref[...]).astype(o_ref.dtype)


# --------------------------------------------------------------------------- #
# fused single-call fast path (x resident in VMEM)
# --------------------------------------------------------------------------- #
def _make_fused_kernel(N, C, S, half1, eps):
    inv_s = 1.0 / float(S)
    inv_ns = 1.0 / float(N * S)

    def kernel(x_ref, w_ref, b_ref, o_ref):
        x = x_ref[...].astype(jnp.float32)                       # (N, C, S)
        s1 = jnp.sum(x, axis=-1, keepdims=True)                  # (N, C, 1)
        in_mean = s1 * inv_s
        bn_mean = jnp.sum(s1, axis=0, keepdims=True) * inv_ns    # (1, C, 1)
        cidx = lax.broadcasted_iota(jnp.int32, (1, C, 1), 1)
        is_bn = cidx < half1
        mean = jnp.where(is_bn, bn_mean, in_mean)                # (N, C, 1)
        xc = x - mean
        q = jnp.sum(xc * xc, axis=-1, keepdims=True)             # (N, C, 1)
        in_var = q * inv_s
        bn_var = jnp.sum(q, axis=0, keepdims=True) * inv_ns
        var = jnp.where(is_bn, bn_var, in_var)
        scale = w_ref[...] * lax.rsqrt(var + eps)                # (N, C, 1)
        o_ref[...] = (xc * scale + b_ref[...]).astype(o_ref.dtype)

    return kernel


def _fused_path(x3, bn_w, bn_b, in_w, in_b, half1, N, C, S, vmem_limit):
    w = jnp.concatenate([bn_w.astype(jnp.float32).reshape(-1),
                         in_w.astype(jnp.float32).reshape(-1)]).reshape(1, C, 1)
    b = jnp.concatenate([bn_b.astype(jnp.float32).reshape(-1),
                         in_b.astype(jnp.float32).reshape(-1)]).reshape(1, C, 1)
    return pl.pallas_call(
        _make_fused_kernel(N, C, S, half1, _EPS),
        out_shape=jax.ShapeDtypeStruct((N, C, S), x3.dtype),
        grid=(1,),
        in_specs=[pl.BlockSpec((N, C, S), lambda i: (0, 0, 0)),
                  pl.BlockSpec((1, C, 1), lambda i: (0, 0, 0)),
                  pl.BlockSpec((1, C, 1), lambda i: (0, 0, 0))],
        out_specs=pl.BlockSpec((N, C, S), lambda i: (0, 0, 0)),
        compiler_params=pltpu.CompilerParams(
            dimension_semantics=("arbitrary",),
            vmem_limit_bytes=vmem_limit),
    )(x3, w, b)


# --------------------------------------------------------------------------- #
# two-sweep path (large x): stats sweep + tiny (N, C) fold + apply sweep
# --------------------------------------------------------------------------- #
def _two_sweep_path(x3, bn_w, bn_b, in_w, in_b, half1,
                    N, C, S, vmem_limit, budget):
    rows = N * C
    half2 = C - half1
    x2 = x3.reshape(rows, S)                       # metadata-only reshape
    itemsize = x2.dtype.itemsize
    R, ts = _pick_tiles(rows, S, itemsize, budget)
    n_s = S // ts
    split = 2 if (n_s >= 2 and n_s % 2 == 0) else 1   # keeps v7x's 2nd TC busy
    n_sh = n_s // split
    row_tiles = pl.cdiv(rows, R)

    # ---- sweep 1: single-pass sum / sum-of-squares ------------------------ #
    sum_acc, sq_acc = pl.pallas_call(
        _stats_kernel,
        out_shape=(jax.ShapeDtypeStruct((split, rows, 128), jnp.float32),
                   jax.ShapeDtypeStruct((split, rows, 128), jnp.float32)),
        grid=(split, row_tiles, n_sh),
        in_specs=[pl.BlockSpec((R, ts), lambda h, r, s: (r, h * n_sh + s))],
        out_specs=(pl.BlockSpec((None, R, 128), lambda h, r, s: (h, r, 0)),
                   pl.BlockSpec((None, R, 128), lambda h, r, s: (h, r, 0))),
        compiler_params=pltpu.CompilerParams(
            dimension_semantics=("parallel", "parallel", "arbitrary"),
            vmem_limit_bytes=vmem_limit),
    )(x2)

    # ---- tiny (N, C) math: fold norm + affine into per-row scale/shift ---- #
    s1 = jnp.sum(sum_acc, axis=(0, 2)).reshape(N, C)
    s2 = jnp.sum(sq_acc, axis=(0, 2)).reshape(N, C)
    inv_s = 1.0 / float(S)

    # TODO(synk): single-pass E[x^2]-E[x]^2 variance (clamped) can lose precision
    # for strongly non-centered data; the fused fast path uses the two-pass form.
    scales, shifts = [], []
    if half1 > 0:                      # BatchNorm3d half: stats over (N, S)
        t1 = jnp.sum(s1[:, :half1], axis=0)
        t2 = jnp.sum(s2[:, :half1], axis=0)
        mean = t1 * (inv_s / N)
        var = jnp.maximum(t2 * (inv_s / N) - mean * mean, 0.0)
        sc = bn_w.astype(jnp.float32) * lax.rsqrt(var + _EPS)
        sh = bn_b.astype(jnp.float32) - mean * sc
        scales.append(jnp.broadcast_to(sc[None, :], (N, half1)))
        shifts.append(jnp.broadcast_to(sh[None, :], (N, half1)))
    if half2 > 0:                      # InstanceNorm3d half: stats over S per (n, c)
        mean = s1[:, half1:] * inv_s
        var = jnp.maximum(s2[:, half1:] * inv_s - mean * mean, 0.0)
        sc = in_w.astype(jnp.float32)[None, :] * lax.rsqrt(var + _EPS)
        sh = in_b.astype(jnp.float32)[None, :] - mean * sc
        scales.append(sc)
        shifts.append(sh)
    scale = scales[0] if len(scales) == 1 else jnp.concatenate(scales, axis=1)
    shift = shifts[0] if len(shifts) == 1 else jnp.concatenate(shifts, axis=1)
    scale = scale.reshape(rows, 1)
    shift = shift.reshape(rows, 1)

    # ---- sweep 2: lane-dense fused scale/shift apply ----------------------- #
    out2 = pl.pallas_call(
        _apply_kernel,
        out_shape=jax.ShapeDtypeStruct((rows, S), x2.dtype),
        grid=(row_tiles, n_s),
        in_specs=[pl.BlockSpec((R, ts), lambda r, s: (r, s)),
                  pl.BlockSpec((R, 1), lambda r, s: (r, 0)),
                  pl.BlockSpec((R, 1), lambda r, s: (r, 0))],
        out_specs=pl.BlockSpec((R, ts), lambda r, s: (r, s)),
        compiler_params=pltpu.CompilerParams(
            dimension_semantics=("parallel", "parallel"),
            vmem_limit_bytes=vmem_limit),
    )(x2, scale, shift)

    return out2.reshape(N, C, S)


# --------------------------------------------------------------------------- #
# public forward
# --------------------------------------------------------------------------- #
def bnin_forward(x, bn_weight, bn_bias, in_weight, in_bias, half_bn=0.6,
                 allow_fused=True, tile_budget_bytes=None):
    """x: (N, C, D, H, W).  Returns (N, C, D, H, W).  Training-mode forward."""
    N, C, D, H, W = x.shape
    half1 = int(C * half_bn)
    S = D * H * W
    x3 = x.reshape(N, C, S)            # metadata-only reshape (row-major)

    vmem_limit = _vmem_limit_bytes()

    # TODO(synk): BatchNorm3d running_mean/running_var buffer updates are not
    # reproduced here (forward output only).

    fused_ok = allow_fused and (N * C * S * 4 * 10 <= vmem_limit)
    if fused_ok:
        out3 = _fused_path(x3, bn_weight, bn_bias, in_weight, in_bias,
                           half1, N, C, S, vmem_limit)
    else:
        budget = tile_budget_bytes if tile_budget_bytes else max(1 << 20,
                                                                 vmem_limit // 8)
        out3 = _two_sweep_path(x3, bn_weight, bn_bias, in_weight, in_bias,
                               half1, N, C, S, vmem_limit, budget)
    return out3.reshape(N, C, D, H, W)


# --------------------------------------------------------------------------- #
# pure-JAX reference of the PyTorch forward (train mode)
# --------------------------------------------------------------------------- #
def _reference(x, bn_weight, bn_bias, in_weight, in_bias, half_bn=0.6):
    N, C, D, H, W = x.shape
    half1 = int(C * half_bn)
    xb, xi = x[:, :half1], x[:, half1:]
    mb = jnp.mean(xb, axis=(0, 2, 3, 4), keepdims=True)
    vb = jnp.mean((xb - mb) ** 2, axis=(0, 2, 3, 4), keepdims=True)
    ob = (xb - mb) / jnp.sqrt(vb + _EPS)
    ob = ob * bn_weight.reshape(1, -1, 1, 1, 1) + bn_bias.reshape(1, -1, 1, 1, 1)
    mi = jnp.mean(xi, axis=(2, 3, 4), keepdims=True)
    vi = jnp.mean((xi - mi) ** 2, axis=(2, 3, 4), keepdims=True)
    oi = (xi - mi) / jnp.sqrt(vi + _EPS)
    oi = oi * in_weight.reshape(1, -1, 1, 1, 1) + in_bias.reshape(1, -1, 1, 1, 1)
    return jnp.concatenate([ob, oi], axis=1)


if __name__ == "__main__":
    def make_inputs(key, N, C, D, H, W, half_bn):
        half1 = int(C * half_bn)
        half2 = C - half1
        k0, k1, k2, k3, k4 = jax.random.split(key, 5)
        x = jax.random.normal(k0, (N, C, D, H, W), dtype=jnp.float32)
        bn_w = 1.0 + 0.1 * jax.random.normal(k1, (half1,), dtype=jnp.float32)
        bn_b = 0.1 * jax.random.normal(k2, (half1,), dtype=jnp.float32)
        in_w = 1.0 + 0.1 * jax.random.normal(k3, (half2,), dtype=jnp.float32)
        in_b = 0.1 * jax.random.normal(k4, (half2,), dtype=jnp.float32)
        return x, bn_w, bn_b, in_w, in_b

    key = jax.random.PRNGKey(0)
    cases = [
        # (shape, half_bn, kwargs)
        ((2, 10, 4, 8, 8), 0.6, dict()),                           # fused fast path
        ((2, 10, 4, 8, 8), 0.6, dict(allow_fused=False)),          # two-sweep, single tile
        ((2, 10, 4, 16, 16), 0.6, dict(allow_fused=False,          # multi-tile: S split,
                                       tile_budget_bytes=16 * 1024)),  # ragged row blocks
        ((2, 10, 3, 5, 7), 0.6, dict(allow_fused=False)),          # ragged-S tail path
    ]
    for idx, (shape, hb, kw) in enumerate(cases):
        key, sub = jax.random.split(key)
        x, bn_w, bn_b, in_w, in_b = make_inputs(sub, *shape, hb)
        out = jax.block_until_ready(
            bnin_forward(x, bn_w, bn_b, in_w, in_b, hb, **kw))
        ref = _reference(x, bn_w, bn_b, in_w, in_b, hb)
        assert out.shape == x.shape, f"shape mismatch in case {idx}"
        assert jnp.allclose(out, ref, atol=2e-4, rtol=2e-4), \
            f"mismatch vs reference in case {idx}"
    print("KERNEL_OK")
</pallas_src>

<mosaic_0001>
module attributes {stable_mosaic.version = 11 : i64} {
  func.func @kernel(%arg0: i32, %arg1: memref<2x10x256xf32, #tpu.memory_space<vmem>>, %arg2: memref<1x10x1xf32, #tpu.memory_space<vmem>>, %arg3: memref<1x10x1xf32, #tpu.memory_space<vmem>>, %arg4: memref<2x10x256xf32, #tpu.memory_space<vmem>>) attributes {dimension_semantics = [#tpu.dimension_semantics<arbitrary>], iteration_bounds = array<i64: 1>, scalar_prefetch = 0 : i64, scratch_operands = 0 : i64, tpu.core_type = #tpu.core_type<tc>, window_params = [{pipeline_mode = #tpu.pipeline_mode<synchronous>, transform_indices = @transform_0, window_bounds = array<i64: 2, 10, 256>}, {pipeline_mode = #tpu.pipeline_mode<synchronous>, transform_indices = @transform_1, window_bounds = array<i64: 1, 10, 1>}, {pipeline_mode = #tpu.pipeline_mode<synchronous>, transform_indices = @transform_2, window_bounds = array<i64: 1, 10, 1>}, {pipeline_mode = #tpu.pipeline_mode<synchronous>, transform_indices = @transform_3, window_bounds = array<i64: 2, 10, 256>}]} {
    %c0 = arith.constant 0 : index
    %c0_0 = arith.constant 0 : index
    %c0_1 = arith.constant 0 : index
    %0 = vector.load %arg1[%c0, %c0_0, %c0_1] : memref<2x10x256xf32, #tpu.memory_space<vmem>>, vector<2x10x256xf32>
    %cst = arith.constant dense<0.000000e+00> : vector<2x10xf32>
    %1 = vector.multi_reduction <add>, %0, %cst [2] : vector<2x10x256xf32> to vector<2x10xf32>
    %2 = vector.shape_cast %1 : vector<2x10xf32> to vector<2x10x1xf32>
    %cst_2 = arith.constant 3.906250e-03 : f32
    %3 = vector.broadcast %cst_2 : f32 to vector<2x10x1xf32>
    %4 = arith.mulf %2, %3 : vector<2x10x1xf32>
    %cst_3 = arith.constant dense<0.000000e+00> : vector<10x1xf32>
    %5 = vector.multi_reduction <add>, %2, %cst_3 [0] : vector<2x10x1xf32> to vector<10x1xf32>
    %6 = vector.shape_cast %5 : vector<10x1xf32> to vector<1x10x1xf32>
    %cst_4 = arith.constant 0.001953125 : f32
    %7 = vector.broadcast %cst_4 : f32 to vector<1x10x1xf32>
    %8 = arith.mulf %6, %7 : vector<1x10x1xf32>
    %9 = tpu.iota {dimensions = array<i32: 1>} : vector<1x10x1xi32>
    %c6_i32 = arith.constant 6 : i32
    %10 = vector.broadcast %c6_i32 : i32 to vector<1x10x1xi32>
    %11 = arith.cmpi slt, %9, %10 : vector<1x10x1xi32>
    %12 = vector.shape_cast %11 : vector<1x10x1xi1> to vector<1x10x1xi1>
    %13 = vector.broadcast %12 : vector<1x10x1xi1> to vector<2x10x1xi1>
    %14 = vector.shape_cast %8 : vector<1x10x1xf32> to vector<1x10x1xf32>
    %15 = vector.broadcast %14 : vector<1x10x1xf32> to vector<2x10x1xf32>
    %16 = arith.select %13, %15, %4 : vector<2x10x1xi1>, vector<2x10x1xf32>
    %17 = vector.broadcast %16 : vector<2x10x1xf32> to vector<2x10x256xf32>
    %18 = arith.subf %0, %17 : vector<2x10x256xf32>
    %19 = arith.mulf %18, %18 : vector<2x10x256xf32>
    %cst_5 = arith.constant dense<0.000000e+00> : vector<2x10xf32>
    %20 = vector.multi_reduction <add>, %19, %cst_5 [2] : vector<2x10x256xf32> to vector<2x10xf32>
    %21 = vector.shape_cast %20 : vector<2x10xf32> to vector<2x10x1xf32>
    %cst_6 = arith.constant 3.906250e-03 : f32
    %22 = vector.broadcast %cst_6 : f32 to vector<2x10x1xf32>
    %23 = arith.mulf %21, %22 : vector<2x10x1xf32>
    %cst_7 = arith.constant dense<0.000000e+00> : vector<10x1xf32>
    %24 = vector.multi_reduction <add>, %21, %cst_7 [0] : vector<2x10x1xf32> to vector<10x1xf32>
    %25 = vector.shape_cast %24 : vector<10x1xf32> to vector<1x10x1xf32>
    %cst_8 = arith.constant 0.001953125 : f32
    %26 = vector.broadcast %cst_8 : f32 to vector<1x10x1xf32>
    %27 = arith.mulf %25, %26 : vector<1x10x1xf32>
    %28 = vector.shape_cast %11 : vector<1x10x1xi1> to vector<1x10x1xi1>
    %29 = vector.broadcast %28 : vector<1x10x1xi1> to vector<2x10x1xi1>
    %30 = vector.shape_cast %27 : vector<1x10x1xf32> to vector<1x10x1xf32>
    %31 = vector.broadcast %30 : vector<1x10x1xf32> to vector<2x10x1xf32>
    %32 = arith.select %29, %31, %23 : vector<2x10x1xi1>, vector<2x10x1xf32>
    %c0_9 = arith.constant 0 : index
    %c0_10 = arith.constant 0 : index
    %c0_11 = arith.constant 0 : index
    %33 = vector.load %arg2[%c0_9, %c0_10, %c0_11] : memref<1x10x1xf32, #tpu.memory_space<vmem>>, vector<1x10x1xf32>
    %cst_12 = arith.constant 9.99999974E-6 : f32
    %34 = vector.broadcast %cst_12 : f32 to vector<2x10x1xf32>
    %35 = arith.addf %32, %34 : vector<2x10x1xf32>
    %36 = math.rsqrt %35 : vector<2x10x1xf32>
    %37 = vector.broadcast %33 : vector<1x10x1xf32> to vector<2x10x1xf32>
    %38 = arith.mulf %37, %36 : vector<2x10x1xf32>
    %39 = vector.broadcast %38 : vector<2x10x1xf32> to vector<2x10x256xf32>
    %40 = arith.mulf %18, %39 : vector<2x10x256xf32>
    %c0_13 = arith.constant 0 : index
    %c0_14 = arith.constant 0 : index
    %c0_15 = arith.constant 0 : index
    %41 = vector.load %arg3[%c0_13, %c0_14, %c0_15] : memref<1x10x1xf32, #tpu.memory_space<vmem>>, vector<1x10x1xf32>
    %42 = vector.broadcast %41 : vector<1x10x1xf32> to vector<2x10x256xf32>
    %43 = arith.addf %40, %42 : vector<2x10x256xf32>
    %c0_16 = arith.constant 0 : index
    %c0_17 = arith.constant 0 : index
    %c0_18 = arith.constant 0 : index
    %44 = vector.load %arg4[%c0_16, %c0_17, %c0_18] : memref<2x10x256xf32, #tpu.memory_space<vmem>>, vector<2x10x256xf32>
    tpu.vector_store %arg4[%c0_16, %c0_17, %c0_18], %43 {strides = array<i32>} : memref<2x10x256xf32, #tpu.memory_space<vmem>>, vector<2x10x256xf32>,
    return
  }
  func.func @transform_0(%arg0: i32) -> (i32, i32, i32) {
    %c0_i32 = arith.constant 0 : i32
    %c0_i32_0 = arith.constant 0 : i32
    %c0_i32_1 = arith.constant 0 : i32
    %c0_i32_2 = arith.constant 0 : i32
    return %c0_i32, %c0_i32_0, %c0_i32_1 : i32, i32, i32
  }
  func.func @transform_1(%arg0: i32) -> (i32, i32, i32) {
    %c0_i32 = arith.constant 0 : i32
    %c0_i32_0 = arith.constant 0 : i32
    %c0_i32_1 = arith.constant 0 : i32
    %c0_i32_2 = arith.constant 0 : i32
    return %c0_i32, %c0_i32_0, %c0_i32_1 : i32, i32, i32
  }
  func.func @transform_2(%arg0: i32) -> (i32, i32, i32) {
    %c0_i32 = arith.constant 0 : i32
    %c0_i32_0 = arith.constant 0 : i32
    %c0_i32_1 = arith.constant 0 : i32
    %c0_i32_2 = arith.constant 0 : i32
    return %c0_i32, %c0_i32_0, %c0_i32_1 : i32, i32, i32
  }
  func.func @transform_3(%arg0: i32) -> (i32, i32, i32) {
    %c0_i32 = arith.constant 0 : i32
    %c0_i32_0 = arith.constant 0 : i32
    %c0_i32_1 = arith.constant 0 : i32
    %c0_i32_2 = arith.constant 0 : i32
    return %c0_i32, %c0_i32_0, %c0_i32_1 : i32, i32, i32
  }
}

</mosaic_0001>

<llo_original>
// kernel: tpu_custom_call.1
$region0: #{tpu_custom_call.1}
  #allocation0 [shape = 'u32[]', space=smem, size = 0x4, offset = 0x4, fixed_abs, tag = 'smem constant byte address 0x4 - core index']
  #allocation1 [shape = 'u32[144,128]{1,0:T(1,128)}', space=vmem, size = 0x12000, scoped, tag = 'internal scratch']
  %s0 = inlined_call_operand.vmem [shape: f32[2,10,256], index: 0, kind: input, shape index: {}]
  %s1 = inlined_call_operand.vmem [shape: f32[1,10,1], index: 1, kind: input, shape index: {}]
  %s2 = inlined_call_operand.vmem [shape: f32[1,10,1], index: 2, kind: input, shape index: {}]
  %s3 = inlined_call_operand.vmem [shape: f32[2,10,256], index: 3, kind: output, shape index: {}]
  %s4 = sld [smem:[#allocation0]]
  $region22: #{tpu_custom_call.1} parent=0
    _
  %s6 = ssub.s32 1, %s4
  %s7 = scalar_select 0, %s6, %s4
  // Predicated region
  $region2: #{tpu_custom_call.1} parent=0 // pred_check
    _
  $region3: #{tpu_custom_call.1} parent=0 // pred_check_branch
    %9 = sbr.rel (0) target = $region5
  $region4: #{tpu_custom_call.1} parent=0 // pred_region
    _
  $region5: #{tpu_custom_call.1} parent=0 // pred_fallthru
    _
  // Predicated region
  $region6: #{tpu_custom_call.1} parent=0 // pred_check
    _
  $region7: #{tpu_custom_call.1} parent=0 // pred_check_branch
    %11 = sbr.rel (0) target = $region9
  $region8: #{tpu_custom_call.1} parent=0 // pred_region
    _
  $region9: #{tpu_custom_call.1} parent=0 // pred_fallthru
    _
  // Predicated region
  $region10: #{tpu_custom_call.1} parent=0 // pred_check
    _
  $region11: #{tpu_custom_call.1} parent=0 // pred_check_branch
    %13 = sbr.rel (0) target = $region13
  $region12: #{tpu_custom_call.1} parent=0 // pred_region
    _
  $region13: #{tpu_custom_call.1} parent=0 // pred_fallthru
    _
  %v14 = vld [vmem:[%s0] sm:$0xff]
  %v15 = vld [vmem:[%s0 + $0x8] sm:$0xff]
  %v16 = vld [vmem:[%s0 + $0x10] sm:$0x3]
  %v17 = vld [vmem:[%s0 + $0x18] sm:$0x3]
  %v18 = vld [vmem:[%s0 + $0x20] sm:$0xff]
  %v19 = vld [vmem:[%s0 + $0x28] sm:$0xff]
  %v20 = vld [vmem:[%s0 + $0x30] sm:$0x3]
  %v21 = vld [vmem:[%s0 + $0x38] sm:$0x3]
  %v22 = vadd.f32 %v14, %v15
  %23 = vadd.xlane.f32.xlu0 %v22
  %v24 = vpop.xlane.xlu0 %23
  %vm25 = vcmask 1041408
  %v26 = vsel %vm25, %v16, 0.0
  %v27 = vsel %vm25, %v17, 0.0
  %v28 = vadd.f32 %v26, %v27
  %29 = vadd.xlane.f32.xlu0 %v28
  %v30 = vpop.xlane.xlu0 %29
  %v31 = vadd.f32 %v18, %v19
  %32 = vadd.xlane.f32.xlu0 %v31
  %v33 = vpop.xlane.xlu0 %32
  %v34 = vsel %vm25, %v20, 0.0
  %v35 = vsel %vm25, %v21, 0.0
  %v36 = vadd.f32 %v34, %v35
  %37 = vadd.xlane.f32.xlu0 %v36
  %v38 = vpop.xlane.xlu0 %37
  %v39 = vmul.f32 %v24, 0.00390625
  %v40 = vmul.f32 %v30, 0.00390625
  %v41 = vmul.f32 %v33, 0.00390625
  %v42 = vmul.f32 %v38, 0.00390625
  %v43 = vadd.f32 %v24, %v33
  %v44 = vsel %vm25, %v30, 0.0
  %v45 = vsel %vm25, %v38, 0.0
  %v46 = vadd.f32 %v44, %v45
  %v47 = vmul.f32 %v43, 0.001953125
  %v48 = vmul.f32 %v46, 0.001953125
  %v49 = vlaneseq
  %v50 = vshrl.u32 %v49, 7
  %v51 = vadd.s32 %v50, 8
  %vm52 = vcmp.lt.s32.totalorder %v50, 6
  %vm53 = vcmp.lt.s32.totalorder %v51, 6
  %v54 = vsel %vm52, 1, 0
  %v55 = vsel %vm53, 1, 0
  %vm56 = vcmp.eq.s32.totalorder %v54, 1
  %vm57 = vcmp.eq.s32.totalorder %v55, 1
  %v58 = vsel %vm56, %v47, %v39
  %v59 = vsel %vm57, %v48, %v40
  %v60 = vsel %vm56, %v47, %v41
  %v61 = vsel %vm57, %v48, %v42
  %v62 = vsub.f32 %v14, %v58
  %v63 = vsub.f32 %v15, %v58
  %v64 = vsub.f32 %v16, %v59
  %v65 = vsub.f32 %v17, %v59
  %v66 = vsub.f32 %v18, %v60
  %v67 = vsub.f32 %v19, %v60
  %v68 = vsub.f32 %v20, %v61
  %v69 = vsub.f32 %v21, %v61
  %v70 = vmul.f32 %v62, %v62
  %v71 = vmul.f32 %v63, %v63
  %v72 = vmul.f32 %v64, %v64
  %v73 = vmul.f32 %v65, %v65
  %v74 = vmul.f32 %v66, %v66
  %v75 = vmul.f32 %v67, %v67
  %v76 = vmul.f32 %v68, %v68
  %v77 = vmul.f32 %v69, %v69
  %v78 = vadd.f32 %v70, %v71
  %79 = vadd.xlane.f32.xlu0 %v78
  %v80 = vpop.xlane.xlu0 %79
  %v81 = vsel %vm25, %v72, 0.0
  %v82 = vsel %vm25, %v73, 0.0
  %v83 = vadd.f32 %v81, %v82
  %84 = vadd.xlane.f32.xlu0 %v83
  %v85 = vpop.xlane.xlu0 %84
  %v86 = vadd.f32 %v74, %v75
  %87 = vadd.xlane.f32.xlu0 %v86
  %v88 = vpop.xlane.xlu0 %87
  %v89 = vsel %vm25, %v76, 0.0
  %v90 = vsel %vm25, %v77, 0.0
  %v91 = vadd.f32 %v89, %v90
  %92 = vadd.xlane.f32.xlu0 %v91
  %v93 = vpop.xlane.xlu0 %92
  %v94 = vmul.f32 %v80, 0.00390625
  %v95 = vmul.f32 %v85, 0.00390625
  %v96 = vmul.f32 %v88, 0.00390625
  %v97 = vmul.f32 %v93, 0.00390625
  %v98 = vadd.f32 %v80, %v88
  %v99 = vsel %vm25, %v85, 0.0
  %v100 = vsel %vm25, %v93, 0.0
  %v101 = vadd.f32 %v99, %v100
  %v102 = vmul.f32 %v98, 0.001953125
  %v103 = vmul.f32 %v101, 0.001953125
  %v104 = vsel %vm56, %v102, %v94
  %v105 = vsel %vm57, %v103, %v95
  %v106 = vsel %vm56, %v102, %v96
  %v107 = vsel %vm57, %v103, %v97
  %v108 = vld [vmem:[%s1] sm:$0xff]
  %v109 = vld [vmem:[%s1 + $0x8] sm:$0x3]
  %v110 = vadd.f32 %v104, 1e-05
  %v111 = vadd.f32 %v105, 1e-05
  %v112 = vadd.f32 %v106, 1e-05
  %v113 = vadd.f32 %v107, 1e-05
  %v114 = vrsqrt.pop %v110
  %v115 = vrsqrt.pop %v111
  %v116 = vrsqrt.pop %v112
  %v117 = vrsqrt.pop %v113
  %v118 = vmul.f32 %v108, %v114
  %v119 = vmul.f32 %v109, %v115
  %v120 = vmul.f32 %v108, %v116
  %v121 = vmul.f32 %v109, %v117
  %123 = vset.pattern.permute.xlu0 0
  %124 = vperm.xlu0 %123, %v118
  %v125 = vpop.permute.xlu0 %124
  %128 = vset.pattern.permute.xlu0 0
  %129 = vperm.xlu0 %128, %v119
  %v130 = vpop.permute.xlu0 %129
  %133 = vset.pattern.permute.xlu0 0
  %134 = vperm.xlu0 %133, %v120
  %v135 = vpop.permute.xlu0 %134
  %138 = vset.pattern.permute.xlu0 0
  %139 = vperm.xlu0 %138, %v121
  %v140 = vpop.permute.xlu0 %139
  %v142 = vmul.f32 %v62, %v125
  %v143 = vmul.f32 %v63, %v125
  %v144 = vmul.f32 %v64, %v130
  %v145 = vmul.f32 %v65, %v130
  %v146 = vmul.f32 %v66, %v135
  %v147 = vmul.f32 %v67, %v135
  %v148 = vmul.f32 %v68, %v140
  %v149 = vmul.f32 %v69, %v140
  %v150 = vld [vmem:[%s2] sm:$0xff]
  %v151 = vld [vmem:[%s2 + $0x8] sm:$0x3]
  %153 = vset.pattern.permute.xlu0 0
  %154 = vperm.xlu0 %153, %v150
  %v155 = vpop.permute.xlu0 %154
  %158 = vset.pattern.permute.xlu0 0
  %159 = vperm.xlu0 %158, %v151
  %v160 = vpop.permute.xlu0 %159
  %v162 = vadd.f32 %v142, %v155
  %v163 = vadd.f32 %v143, %v155
  %v164 = vadd.f32 %v144, %v160
  %v165 = vadd.f32 %v145, %v160
  %v166 = vadd.f32 %v146, %v155
  %v167 = vadd.f32 %v147, %v155
  %v168 = vadd.f32 %v148, %v160
  %v169 = vadd.f32 %v149, %v160
  %170 = vst [vmem:[%s3] sm:$0xff] %v162
  %171 = vst [vmem:[%s3 + $0x8] sm:$0xff] %v163
  %172 = vst [vmem:[%s3 + $0x10] sm:$0x3] %v164
  %173 = vst [vmem:[%s3 + $0x18] sm:$0x3] %v165
  %174 = vst [vmem:[%s3 + $0x20] sm:$0xff] %v166
  %175 = vst [vmem:[%s3 + $0x28] sm:$0xff] %v167
  %176 = vst [vmem:[%s3 + $0x30] sm:$0x3] %v168
  %177 = vst [vmem:[%s3 + $0x38] sm:$0x3] %v169
  // Predicated region
  $region14: #{tpu_custom_call.1} parent=0 // pred_check
    _
  $region15: #{tpu_custom_call.1} parent=0 // pred_check_branch
    %179 = sbr.rel (0) target = $region17
  $region16: #{tpu_custom_call.1} parent=0 // pred_region
    _
  $region17: #{tpu_custom_call.1} parent=0 // pred_fallthru
    _
  // Predicated region
  $region18: #{tpu_custom_call.1} parent=0 // pred_check
    _
  $region19: #{tpu_custom_call.1} parent=0 // pred_check_branch
    %181 = sbr.rel (0) target = $region21
  $region20: #{tpu_custom_call.1} parent=0 // pred_region
    _
  $region21: #{tpu_custom_call.1} parent=0 // pred_fallthru
    _

</llo_original>
